<compile_context>
chip_gen: v5e
topology: v5e:2x2
jax: 0.10.0
libtpu: 0.0.40
codegen_flags: <defaults>
</compile_context>

<pallas_src>
import functools

import jax
import jax.numpy as jnp
import numpy as np
from jax.experimental import pallas as pl
from jax.experimental.pallas import tpu as pltpu


def _beta_head_kernel(x_ref, w_ref, b_ref, out_ref):
    """Fused: one [TB,F]@[F,2A] matmul + bias + stable softplus + 1, one store."""
    z = jnp.dot(x_ref[...], w_ref[...], preferred_element_type=jnp.float32)
    z = z + b_ref[...]
    # softplus(z) = max(z, 0) + log1p(exp(-|z|))  (stable, matches torch default)
    sp = jnp.maximum(z, 0.0) + jnp.log1p(jnp.exp(-jnp.abs(z)))
    out_ref[...] = (sp + 1.0).astype(out_ref.dtype)


@functools.partial(jax.jit, static_argnames=("block_b",))
def beta_head_forward(x, w_cat, b_cat, *, block_b=512):
    """x: [B, F]; w_cat: [F, 2A] = [W0^T | W1^T]; b_cat: [1, 2A] = [b0 | b1].

    Returns (c1, c0) == (alpha, beta) concentrations of the Beta distribution.
    """
    B, F = x.shape
    two_a = w_cat.shape[1]
    A = two_a // 2

    # Batch tile: as large as practical, multiple of 8 sublanes.
    tb = min(block_b, max(B, 8))
    tb = max(8, (tb // 8) * 8)
    Bp = ((B + tb - 1) // tb) * tb
    if Bp != B:
        x = jnp.pad(x, ((0, Bp - B), (0, 0)))

    out = pl.pallas_call(
        _beta_head_kernel,
        out_shape=jax.ShapeDtypeStruct((Bp, two_a), jnp.float32),
        grid_spec=pl.GridSpec(
            grid=(Bp // tb,),
            in_specs=[
                pl.BlockSpec((tb, F), lambda i: (i, 0)),       # x tile
                pl.BlockSpec((F, two_a), lambda i: (0, 0)),    # fused weight (resident)
                pl.BlockSpec((1, two_a), lambda i: (0, 0)),    # fused bias (resident)
            ],
            out_specs=pl.BlockSpec((tb, two_a), lambda i: (i, 0)),
        ),
        compiler_params=pltpu.CompilerParams(
            dimension_semantics=("parallel",),
        ),
        cost_estimate=pl.CostEstimate(
            flops=2 * Bp * F * two_a,
            transcendentals=2 * Bp * two_a,
            bytes_accessed=4 * (Bp * F + F * two_a + two_a + Bp * two_a),
        ),
    )(x, w_cat, b_cat)

    out = out[:B]
    c0 = out[:, :A]   # beta  (concentration0)
    c1 = out[:, A:]   # alpha (concentration1)
    return c1, c0


def orthogonal_init(key, rows, cols, gain):
    """Deterministic orthogonal init (matches nn.init.orthogonal_ semantics)."""
    a = jax.random.normal(key, (rows, cols), dtype=jnp.float32)
    if rows < cols:
        a = a.T
    q, r = jnp.linalg.qr(a)
    d = jnp.sign(jnp.diagonal(r))
    q = q * d[None, :]
    if rows < cols:
        q = q.T
    return gain * q[:rows, :cols]


if __name__ == "__main__":
    in_features = 32
    action_size = 8
    batch = 8

    key = jax.random.PRNGKey(0)
    k_x, k_w0, k_w1 = jax.random.split(key, 3)

    # Parameters (PyTorch Linear weight shape is [A, F]); fuse once on host.
    w0_torch = orthogonal_init(k_w0, action_size, in_features, gain=0.01)  # [A, F]
    w1_torch = orthogonal_init(k_w1, action_size, in_features, gain=0.01)  # [A, F]
    b0 = jnp.zeros((action_size,), jnp.float32)
    b1 = jnp.zeros((action_size,), jnp.float32)

    w_cat = jnp.concatenate([w0_torch.T, w1_torch.T], axis=1)       # [F, 2A]
    b_cat = jnp.concatenate([b0, b1])[None, :]                      # [1, 2A]

    x = jax.random.normal(k_x, (batch, in_features), dtype=jnp.float32)

    alpha, beta = beta_head_forward(x, w_cat, b_cat)
    jax.block_until_ready((alpha, beta))

    # Reference check in plain JAX.
    def ref_softplus(z):
        return jnp.logaddexp(z, 0.0)

    c0_ref = ref_softplus(x @ w0_torch.T + b0) + 1.0   # beta
    c1_ref = ref_softplus(x @ w1_torch.T + b1) + 1.0   # alpha

    np.testing.assert_allclose(np.asarray(beta), np.asarray(c0_ref), rtol=1e-5, atol=1e-5)
    np.testing.assert_allclose(np.asarray(alpha), np.asarray(c1_ref), rtol=1e-5, atol=1e-5)
    # softplus can underflow to 0 for very negative logits, so use >= 1.0.
    assert np.all(np.asarray(alpha) >= 1.0) and np.all(np.asarray(beta) >= 1.0)

    # TODO(synk): torch.distributions.Independent(Beta(c1, c0), 1) has no Pallas
    # equivalent; the kernel returns the (alpha, beta) concentrations instead.
    print("KERNEL_OK")
</pallas_src>

<mosaic_0001>
module attributes {stable_mosaic.version = 11 : i64} {
  func.func @_beta_head_kernel(%arg0: i32, %arg1: memref<8x32xf32, #tpu.memory_space<vmem>>, %arg2: memref<32x16xf32, #tpu.memory_space<vmem>>, %arg3: memref<1x16xf32, #tpu.memory_space<vmem>>, %arg4: memref<8x16xf32, #tpu.memory_space<vmem>>) attributes {dimension_semantics = [#tpu.dimension_semantics<parallel>], iteration_bounds = array<i64: 1>, scalar_prefetch = 0 : i64, scratch_operands = 0 : i64, tpu.core_type = #tpu.core_type<tc>, window_params = [{transform_indices = @transform_0, window_bounds = array<i64: 8, 32>}, {pipeline_mode = #tpu.pipeline_mode<synchronous>, transform_indices = @transform_1, window_bounds = array<i64: 32, 16>}, {pipeline_mode = #tpu.pipeline_mode<synchronous>, transform_indices = @transform_2, window_bounds = array<i64: 1, 16>}, {transform_indices = @transform_3, window_bounds = array<i64: 8, 16>}]} {
    %c0 = arith.constant 0 : index
    %c0_0 = arith.constant 0 : index
    %0 = vector.load %arg1[%c0, %c0_0] : memref<8x32xf32, #tpu.memory_space<vmem>>, vector<8x32xf32>
    %c0_1 = arith.constant 0 : index
    %c0_2 = arith.constant 0 : index
    %1 = vector.load %arg2[%c0_1, %c0_2] : memref<32x16xf32, #tpu.memory_space<vmem>>, vector<32x16xf32>
    %cst = arith.constant dense<0.000000e+00> : vector<8x16xf32>
    %2 = tpu.matmul %0, %1, %cst {dimension_numbers = #tpu.dot_dimension_numbers<[1], [0], [0], [1], [0, 0, 1, 1], [], []>} : vector<8x32xf32>, vector<32x16xf32>, vector<8x16xf32> -> vector<8x16xf32>
    %c0_3 = arith.constant 0 : index
    %c0_4 = arith.constant 0 : index
    %3 = vector.load %arg3[%c0_3, %c0_4] : memref<1x16xf32, #tpu.memory_space<vmem>>, vector<1x16xf32>
    %4 = vector.broadcast %3 : vector<1x16xf32> to vector<8x16xf32>
    %5 = arith.addf %2, %4 : vector<8x16xf32>
    %cst_5 = arith.constant 0.000000e+00 : f32
    %6 = vector.broadcast %cst_5 : f32 to vector<8x16xf32>
    %7 = arith.maximumf %5, %6 : vector<8x16xf32>
    %8 = math.absf %5 : vector<8x16xf32>
    %cst_6 = arith.constant 0.000000e+00 : f32
    %9 = vector.broadcast %cst_6 : f32 to vector<8x16xf32>
    %10 = arith.subf %9, %8 : vector<8x16xf32>
    %11 = math.exp %10 : vector<8x16xf32>
    %12 = math.log1p %11 : vector<8x16xf32>
    %13 = arith.addf %7, %12 : vector<8x16xf32>
    %cst_7 = arith.constant 1.000000e+00 : f32
    %14 = vector.broadcast %cst_7 : f32 to vector<8x16xf32>
    %15 = arith.addf %13, %14 : vector<8x16xf32>
    %c0_8 = arith.constant 0 : index
    %c0_9 = arith.constant 0 : index
    %16 = vector.load %arg4[%c0_8, %c0_9] : memref<8x16xf32, #tpu.memory_space<vmem>>, vector<8x16xf32>
    tpu.vector_store %arg4[%c0_8, %c0_9], %15 {strides = array<i32>} : memref<8x16xf32, #tpu.memory_space<vmem>>, vector<8x16xf32>,
    return
  }
  func.func @transform_0(%arg0: i32) -> (i32, i32) {
    %c0_i32 = arith.constant 0 : i32
    %c0_i32_0 = arith.constant 0 : i32
    return %arg0, %c0_i32 : i32, i32
  }
  func.func @transform_1(%arg0: i32) -> (i32, i32) {
    %c0_i32 = arith.constant 0 : i32
    %c0_i32_0 = arith.constant 0 : i32
    %c0_i32_1 = arith.constant 0 : i32
    return %c0_i32, %c0_i32_0 : i32, i32
  }
  func.func @transform_2(%arg0: i32) -> (i32, i32) {
    %c0_i32 = arith.constant 0 : i32
    %c0_i32_0 = arith.constant 0 : i32
    %c0_i32_1 = arith.constant 0 : i32
    return %c0_i32, %c0_i32_0 : i32, i32
  }
  func.func @transform_3(%arg0: i32) -> (i32, i32) {
    %c0_i32 = arith.constant 0 : i32
    %c0_i32_0 = arith.constant 0 : i32
    return %arg0, %c0_i32 : i32, i32
  }
}

</mosaic_0001>

<llo_original>
// kernel: beta_head_forward.1
$region0: #{beta_head_forward.1}
  #allocation0 [shape = 'u32[]', space=smem, size = 0x4, offset = 0x4, fixed_abs, tag = 'smem constant byte address 0x4 - core index']
  #allocation1 [shape = 'u32[72,128]{1,0:T(1,128)}', space=vmem, size = 0x9000, scoped, tag = 'internal scratch']
  %s0 = inlined_call_operand.vmem [shape: f32[8,32], index: 0, kind: input, shape index: {}]
  %s1 = inlined_call_operand.vmem [shape: f32[32,16], index: 1, kind: input, shape index: {}]
  %s2 = inlined_call_operand.vmem [shape: f32[1,16], index: 2, kind: input, shape index: {}]
  %s3 = inlined_call_operand.vmem [shape: f32[8,16], index: 3, kind: output, shape index: {}]
  %s4 = sld [smem:[#allocation0]]
  $region22: #{beta_head_forward.1} parent=0
    _
  %s6 = ssub.s32 1, %s4
  %s7 = scalar_select 0, %s6, %s4
  // Predicated region
  $region2: #{beta_head_forward.1} parent=0 // pred_check
    _
  $region3: #{beta_head_forward.1} parent=0 // pred_check_branch
    %9 = sbr.rel (0) target = $region5
  $region4: #{beta_head_forward.1} parent=0 // pred_region
    _
  $region5: #{beta_head_forward.1} parent=0 // pred_fallthru
    _
  // Predicated region
  $region6: #{beta_head_forward.1} parent=0 // pred_check
    _
  $region7: #{beta_head_forward.1} parent=0 // pred_check_branch
    %11 = sbr.rel (0) target = $region9
  $region8: #{beta_head_forward.1} parent=0 // pred_region
    _
  $region9: #{beta_head_forward.1} parent=0 // pred_fallthru
    _
  // Predicated region
  $region10: #{beta_head_forward.1} parent=0 // pred_check
    _
  $region11: #{beta_head_forward.1} parent=0 // pred_check_branch
    %13 = sbr.rel (0) target = $region13
  $region12: #{beta_head_forward.1} parent=0 // pred_region
    _
  $region13: #{beta_head_forward.1} parent=0 // pred_fallthru
    _
  %v14 = vld [vmem:[%s0] sm:$0xff]
  %v15 = vld [vmem:[%s1] sm:$0xff]
  %v16 = vld [vmem:[%s1 + $0x8] sm:$0xff]
  %v17 = vld [vmem:[%s1 + $0x10] sm:$0xff]
  %v18 = vld [vmem:[%s1 + $0x18] sm:$0xff]
  %v19 = vld [vmem:[%s2] sm:$0x1]
  %v21 = vperm.slane %v19, 0
  %vm23 = vcmask 261120
  %v25 = vsel %vm23, %v14, 0
  %27 = vmatpush.msra.mxu0 0.0
  %28 = vmatpush.msra.mxu0 0.0
  %29 = vmatpush.msra.mxu0 0.0
  %30 = vmatpush.msra.mxu0 0.0
  %31 = vmatpush.msra.mxu0 0.0
  %32 = vmatpush.msra.mxu0 0.0
  %33 = vmatpush.msra.mxu0 0.0
  %34 = vmatpush.msra.mxu0 0.0
  %35 = vmatpush.msra.mxu0 0.0
  %36 = vmatpush.msra.mxu0 0.0
  %37 = vmatpush.msra.mxu0 0.0
  %38 = vmatpush.msra.mxu0 0.0
  %39 = vmatpush.msra.mxu0 %v18
  %40 = vmatpush.msra.mxu0 %v17
  %41 = vmatpush.msra.mxu0 %v16
  %42 = vmatpush.msra.mxu0 %v15
  %43 = vmatmul.f32.gmra.mxu0 %v25
  %v44 = vpop.f32.mrf.mxu0
  %v45 = vadd.f32 %v21, %v44
  %46 = vdwg.mxu0
  %v47 = vmax.f32 %v45, 0.0
  %v48 = vand.u32 2147483647, %v45
  %v49 = vsub.f32 0.0, %v48
  %v50 = vmul.f32 %v49, 1.442695
  %v51 = vpow.pop %v50
  %v52 = vadd.f32 %v51, 1.0
  %v53 = vlog2.pop %v52
  %v54 = vmul.f32 %v53, 0.6931472
  %v55 = vmul.f32 -0.5, %v51
  %v56 = vadd.f32 %v55, 1.0
  %v57 = vmul.f32 %v56, %v51
  %v58 = vand.u32 2147483647, %v51
  %vm59 = vcmp.lt.f32.partialorder %v58, 0.0004427343
  %v60 = vsel %vm59, %v57, %v54
  %v61 = vadd.f32 %v47, %v60
  %v62 = vadd.f32 %v61, 1.0
  %vm63 = vcmask 130048
  %64 = vst.msk [vmem:[%s3] sm:$0xff] %vm63, %v62
  // Predicated region
  $region14: #{beta_head_forward.1} parent=0 // pred_check
    _
  $region15: #{beta_head_forward.1} parent=0 // pred_check_branch
    %66 = sbr.rel (0) target = $region17
  $region16: #{beta_head_forward.1} parent=0 // pred_region
    _
  $region17: #{beta_head_forward.1} parent=0 // pred_fallthru
    _
  // Predicated region
  $region18: #{beta_head_forward.1} parent=0 // pred_check
    _
  $region19: #{beta_head_forward.1} parent=0 // pred_check_branch
    %68 = sbr.rel (0) target = $region21
  $region20: #{beta_head_forward.1} parent=0 // pred_region
    _
  $region21: #{beta_head_forward.1} parent=0 // pred_fallthru
    _

</llo_original>
